<compile_context>
chip_gen: v6e
topology: v6e:2x2x1
jax: 0.10.0
libtpu: 0.0.40
codegen_flags: <defaults>
</compile_context>

<pallas_src>
import jax
import jax.numpy as jnp
from jax.experimental import pallas as pl
from jax.experimental.pallas import tpu as pltpu

EPS = 1e-5
LANES = 128
_DEFAULT_TM = 512          # requested rows per tile (capped per-conv by the VMEM budget)
_STATS_SPLITS = 2          # leading "parallel" axis of the stats pass (v7x: one per TC)
_VMEM_BUDGET = 14 << 20    # stay inside v5e's 16 MiB default scoped VMEM with headroom


# ----------------------------------------------------------------------------- Pallas kernels

def _conv_stats_kernel(p_ref, w_ref, z_ref, sum_ref, sq_ref):
    """Pass 1: z = patches @ W (bf16 in, f32 acc); write z (bf16) and accumulate per-channel
    sum(z), sum(z^2) into 8-row-wide partial accumulators (one block per parallel split)."""
    z = jnp.dot(p_ref[...], w_ref[...], preferred_element_type=jnp.float32)
    z_ref[...] = z.astype(z_ref.dtype)

    @pl.when(pl.program_id(1) == 0)
    def _():
        sum_ref[...] = jnp.zeros_like(sum_ref)
        sq_ref[...] = jnp.zeros_like(sq_ref)

    cp = z.shape[-1]
    ps = jnp.zeros((8, cp), jnp.float32)
    pq = jnp.zeros((8, cp), jnp.float32)
    for r in range(0, z.shape[0], 8):          # static, sublane-aligned slices (cheap VPU adds)
        blk = z[r:r + 8, :]
        ps = ps + blk
        pq = pq + blk * blk
    sum_ref[...] += ps
    sq_ref[...] += pq


def _affine_relu_kernel(z_ref, scale_ref, shift_ref, o_ref):
    """Pass 2 (pure epilogue): y = relu(z * scale + shift)   (BN folded into per-channel affine)."""
    z = z_ref[...].astype(jnp.float32)
    o_ref[...] = jnp.maximum(z * scale_ref[...] + shift_ref[...], 0.0).astype(o_ref.dtype)


def _affine_add_relu_kernel(z_ref, scale_ref, shift_ref, s_ref, o_ref):
    """Pass 2 epilogue + identity shortcut add."""
    z = z_ref[...].astype(jnp.float32)
    s = s_ref[...].astype(jnp.float32)
    o_ref[...] = jnp.maximum(z * scale_ref[...] + shift_ref[...] + s, 0.0).astype(o_ref.dtype)


def _affine_proj_relu_kernel(z_ref, scale_ref, shift_ref, xs_ref, w3_ref, o_ref):
    """Pass 2 epilogue + projection (1x1-conv) shortcut as a small fused matmul
    (1x1 bias is pre-folded into shift)."""
    z = z_ref[...].astype(jnp.float32)
    sc = jnp.dot(xs_ref[...], w3_ref[...], preferred_element_type=jnp.float32)
    o_ref[...] = jnp.maximum(z * scale_ref[...] + shift_ref[...] + sc, 0.0).astype(o_ref.dtype)


# ----------------------------------------------------------------------------- pallas_call wrappers

def _row_spec(tm, k):
    return pl.BlockSpec((tm, k), lambda i: (i, 0))


def _bcast_spec(shape):
    return pl.BlockSpec(shape, lambda i: (0, 0))


def _conv_stats_and_z(patches, w_mat, tm, n_tiles, m_true):
    """Tiled pass 1: returns (z_bf16 (Mp, Cp), mean (1, Cp), biased var (1, Cp))."""
    mp, k = patches.shape
    cp = w_mat.shape[1]
    tps = n_tiles // _STATS_SPLITS
    z, s, sq = pl.pallas_call(
        _conv_stats_kernel,
        out_shape=(jax.ShapeDtypeStruct((mp, cp), jnp.bfloat16),
                   jax.ShapeDtypeStruct((_STATS_SPLITS * 8, cp), jnp.float32),
                   jax.ShapeDtypeStruct((_STATS_SPLITS * 8, cp), jnp.float32)),
        grid=(_STATS_SPLITS, tps),
        in_specs=[pl.BlockSpec((tm, k), lambda c, i, t=tps: (c * t + i, 0)),
                  pl.BlockSpec((k, cp), lambda c, i: (0, 0))],
        out_specs=(pl.BlockSpec((tm, cp), lambda c, i, t=tps: (c * t + i, 0)),
                   pl.BlockSpec((8, cp), lambda c, i: (c, 0)),
                   pl.BlockSpec((8, cp), lambda c, i: (c, 0))),
        compiler_params=pltpu.CompilerParams(
            dimension_semantics=("parallel", "arbitrary")),
    )(patches, w_mat)
    tot = jnp.sum(s, axis=0, keepdims=True)                   # zero-padded rows contribute 0
    tot_sq = jnp.sum(sq, axis=0, keepdims=True)
    mean = tot / m_true
    var = jnp.maximum(tot_sq / m_true - mean * mean, 0.0)     # biased (train-mode) variance
    return z, mean, var


def _affine_relu(z, scale, shift, tm, out_dtype, shortcut=None, proj=None):
    """Tiled pass 2 (pure epilogue): relu(z * scale + shift [+ shortcut])."""
    mp, cp = z.shape
    args = [z, scale, shift]
    in_specs = [_row_spec(tm, cp), _bcast_spec((1, cp)), _bcast_spec((1, cp))]
    if proj is not None:                                      # 1x1-conv projection shortcut
        xs, w3 = proj
        kernel = _affine_proj_relu_kernel
        args += [xs, w3]
        in_specs += [_row_spec(tm, xs.shape[1]), _bcast_spec(w3.shape)]
    elif shortcut is not None:                                # identity shortcut
        kernel = _affine_add_relu_kernel
        args += [shortcut]
        in_specs += [_row_spec(tm, cp)]
    else:
        kernel = _affine_relu_kernel
    return pl.pallas_call(
        kernel,
        out_shape=jax.ShapeDtypeStruct((mp, cp), out_dtype),
        grid=(mp // tm,),
        in_specs=in_specs,
        out_specs=_row_spec(tm, cp),
        compiler_params=pltpu.CompilerParams(dimension_semantics=("parallel",)),
    )(*args)


# ----------------------------------------------------------------------------- glue helpers

def _round_up(x, m):
    return (x + m - 1) // m * m


def _cdiv(a, b):
    return -(-a // b)


def _vmem_tm(tm_requested, k, cp):
    """Cap rows-per-tile so pass 1's double-buffered bf16 patch + z tiles plus the resident
    (K, Cp) weight fit the smallest default scoped-VMEM budget (v5e: 16 MiB) without flags."""
    resident = 2 * k * cp * 2 + 4 * _STATS_SPLITS * 8 * cp * 4
    per_row = 2 * (k + cp) * 2
    cap = max((_VMEM_BUDGET - resident) // per_row, 64)
    return max(min(tm_requested, cap // 16 * 16), 16)


def _choose_tiling(m, tm_cap, n_split):
    """Balanced tiling: tile count divisible by n_split, (nearly) equal tiles, rows % 16 == 0.
    Avoids a final tile that is mostly zero padding."""
    m16 = _round_up(m, 16)
    n_tiles = _round_up(max(_cdiv(m16, tm_cap), n_split), n_split)
    tm = _round_up(_cdiv(m16, n_tiles), 16)
    return tm, tm * n_tiles, n_tiles


def _pad_rows(a, rows):
    return jnp.pad(a, ((0, rows - a.shape[0]), (0, 0)))


def _pad_cols(a, cols):
    return jnp.pad(a, ((0, 0), (0, cols - a.shape[1])))


def _pad_chan(v, cp):
    return jnp.pad(v.astype(jnp.float32), (0, cp - v.shape[0])).reshape(1, cp)


def _im2col(x_nhwc, kh, kw, stride, pad):
    """Extract conv patches. Returns (N*Ho*Wo, kh*kw*C), Ho, Wo.  (plain-JAX glue)"""
    xp = jnp.pad(x_nhwc, ((0, 0), (pad, pad), (pad, pad), (0, 0)))
    n, hp, wp, c = xp.shape
    ho = (hp - kh) // stride + 1
    wo = (wp - kw) // stride + 1
    chunks = []
    for dy in range(kh):
        for dx in range(kw):
            chunks.append(xp[:, dy:dy + stride * ho:stride, dx:dx + stride * wo:stride, :])
    p = jnp.concatenate(chunks, axis=-1)                      # (N, Ho, Wo, kh*kw*C)
    return p.reshape(n * ho * wo, kh * kw * c), ho, wo


def _w_to_mat(w_oihw, cp):
    """PyTorch (O, I, KH, KW) -> bf16 matmul weight (KH*KW*I, Cp) matching _im2col columns."""
    o, i, kh, kw = w_oihw.shape
    w = jnp.transpose(w_oihw, (2, 3, 1, 0)).reshape(kh * kw * i, o)
    return _pad_cols(w, cp).astype(jnp.bfloat16)


# ----------------------------------------------------------------------------- Residual module

def init_residual_params(key, input_channels, output_channels, cov1x1):
    ks = jax.random.split(key, 12)
    p = {
        "w1": 0.1 * jax.random.normal(ks[0], (output_channels, input_channels, 3, 3), jnp.float32),
        "b1": 0.1 * jax.random.normal(ks[1], (output_channels,), jnp.float32),
        "w2": 0.1 * jax.random.normal(ks[2], (output_channels, output_channels, 3, 3), jnp.float32),
        "b2": 0.1 * jax.random.normal(ks[3], (output_channels,), jnp.float32),
        "g1": 1.0 + 0.1 * jax.random.normal(ks[4], (output_channels,), jnp.float32),
        "beta1": 0.1 * jax.random.normal(ks[5], (output_channels,), jnp.float32),
        "g2": 1.0 + 0.1 * jax.random.normal(ks[6], (output_channels,), jnp.float32),
        "beta2": 0.1 * jax.random.normal(ks[7], (output_channels,), jnp.float32),
    }
    if cov1x1:
        p["w3"] = 0.1 * jax.random.normal(ks[8], (output_channels, input_channels, 1, 1), jnp.float32)
        p["b3"] = 0.1 * jax.random.normal(ks[9], (output_channels,), jnp.float32)
    return p


def residual_forward_nhwc(x_nhwc, params, strides=1, cov1x1=False, tm=_DEFAULT_TM):
    """NHWC-in / NHWC-out Pallas Residual (use directly when stacking blocks)."""
    n, h, w, cin = x_nhwc.shape
    cout = params["w1"].shape[0]
    cp = _round_up(cout, LANES)                               # lane-dense channel axis
    x_bf = x_nhwc.astype(jnp.bfloat16)

    w1 = _w_to_mat(params["w1"], cp)
    w2 = _w_to_mat(params["w2"], cp)
    # Conv biases b1/b2 are dropped on purpose: BN's mean subtraction cancels them exactly.

    # ---- conv1 (matmul + stats, one pass) -> bn1 affine + relu (epilogue) ----
    p1, ho, wo = _im2col(x_bf, 3, 3, strides, 1)
    m1 = p1.shape[0]
    tm1 = _vmem_tm(tm, p1.shape[1], cp)
    tm1, mp1, nt1 = _choose_tiling(m1, tm1, _STATS_SPLITS)
    p1 = _pad_rows(p1, mp1)
    z1, mean1, var1 = _conv_stats_and_z(p1, w1, tm1, nt1, m1)
    scale1 = _pad_chan(params["g1"], cp) * jax.lax.rsqrt(var1 + EPS)
    shift1 = _pad_chan(params["beta1"], cp) - mean1 * scale1
    y1 = _affine_relu(z1, scale1, shift1, tm1, jnp.bfloat16)
    y1_sp = y1[:m1, :cout].reshape(n, ho, wo, cout)           # padded rows/cols sliced off

    # ---- conv2 (matmul + stats) -> bn2 affine + shortcut + relu (epilogue) ----
    p2, _, _ = _im2col(y1_sp, 3, 3, 1, 1)
    m2 = p2.shape[0]
    tm2 = _vmem_tm(tm, p2.shape[1], cp)
    tm2, mp2, nt2 = _choose_tiling(m2, tm2, _STATS_SPLITS)
    p2 = _pad_rows(p2, mp2)
    z2, mean2, var2 = _conv_stats_and_z(p2, w2, tm2, nt2, m2)
    scale2 = _pad_chan(params["g2"], cp) * jax.lax.rsqrt(var2 + EPS)
    shift2 = _pad_chan(params["beta2"], cp) - mean2 * scale2

    if cov1x1:                                                # projection shortcut (1x1 conv)
        xs, _, _ = _im2col(x_bf, 1, 1, strides, 0)            # (M2, Cin) bf16
        shift2 = shift2 + _pad_chan(params["b3"], cp)         # fold 1x1 bias into the shift
        proj = (_pad_rows(xs, mp2), _w_to_mat(params["w3"], cp))
        out = _affine_relu(z2, scale2, shift2, tm2, jnp.bfloat16, proj=proj)
    else:                                                     # identity shortcut (bf16 stream)
        assert strides == 1 and cin == cout, "identity shortcut needs stride=1 and Cin==Cout"
        sc = _pad_rows(_pad_cols(x_bf.reshape(n * h * w, cin), cp), mp2)
        out = _affine_relu(z2, scale2, shift2, tm2, jnp.bfloat16, shortcut=sc)

    return out[:m2, :cout].reshape(n, ho, wo, cout)


def residual_forward(x_nchw, params, strides=1, cov1x1=False, tm=_DEFAULT_TM):
    """Pallas implementation of Residual.forward; x is NCHW, output is NCHW (same dtype)."""
    x_nhwc = jnp.transpose(x_nchw, (0, 2, 3, 1))
    out = residual_forward_nhwc(x_nhwc, params, strides=strides, cov1x1=cov1x1, tm=tm)
    return jnp.transpose(out, (0, 3, 1, 2)).astype(x_nchw.dtype)


# ----------------------------------------------------------------------------- pure-JAX reference

def _ref_forward(x, p, strides, cov1x1):
    def conv(x, w, b, s, pad):
        y = jax.lax.conv_general_dilated(x, w, (s, s), [(pad, pad), (pad, pad)],
                                         dimension_numbers=("NCHW", "OIHW", "NCHW"))
        return y + b[None, :, None, None]

    def bn(x, g, beta):
        mean = x.mean(axis=(0, 2, 3), keepdims=True)
        var = ((x - mean) ** 2).mean(axis=(0, 2, 3), keepdims=True)
        return (g[None, :, None, None] * (x - mean) * jax.lax.rsqrt(var + EPS)
                + beta[None, :, None, None])

    y = jax.nn.relu(bn(conv(x, p["w1"], p["b1"], strides, 1), p["g1"], p["beta1"]))
    y = bn(conv(y, p["w2"], p["b2"], 1, 1), p["g2"], p["beta2"])
    sc = conv(x, p["w3"], p["b3"], strides, 0) if cov1x1 else x
    return jax.nn.relu(y + sc)


# ----------------------------------------------------------------------------- main

if __name__ == "__main__":
    key = jax.random.PRNGKey(0)
    kx, kp1, kp2 = jax.random.split(key, 3)

    # Matmuls run in bf16 on the MXU (f32 accumulation) and the streamed z / output are bf16;
    # compare against the all-f32 reference with a correspondingly relaxed tolerance.
    TOL = dict(atol=5e-2, rtol=5e-2)

    # Case 1: identity shortcut (cov1x1=False, stride=1, Cin == Cout).
    # tm=128 forces a multi-tile grid (M = 2*16*16 = 512 -> 4 tiles across the 2-way split),
    # exercising the streaming stats-accumulator + z-writeback path.
    x1 = jax.random.normal(kx, (2, 4, 16, 16), jnp.float32)
    params1 = init_residual_params(kp1, 4, 4, cov1x1=False)
    ref1 = _ref_forward(x1, params1, 1, False)
    out1 = residual_forward(x1, params1, strides=1, cov1x1=False, tm=128)
    jax.block_until_ready(out1)
    assert out1.shape == (2, 4, 16, 16)
    assert jnp.allclose(out1, ref1, **TOL), float(jnp.max(jnp.abs(out1 - ref1)))

    # Same case with the default (large-tile) tiling.
    out1b = residual_forward(x1, params1, strides=1, cov1x1=False)
    jax.block_until_ready(out1b)
    assert jnp.allclose(out1b, ref1, **TOL), float(jnp.max(jnp.abs(out1b - ref1)))

    # Case 2: projection shortcut (cov1x1=True, stride=2, Cin=4 -> Cout=8).
    params2 = init_residual_params(kp2, 4, 8, cov1x1=True)
    ref2 = _ref_forward(x1, params2, 2, True)
    out2 = residual_forward(x1, params2, strides=2, cov1x1=True, tm=128)
    jax.block_until_ready(out2)
    assert out2.shape == (2, 8, 8, 8)
    assert jnp.allclose(out2, ref2, **TOL), float(jnp.max(jnp.abs(out2 - ref2)))

    print("KERNEL_OK")
</pallas_src>

<mosaic_0001>
module attributes {stable_mosaic.version = 11 : i64} {
  func.func @_conv_stats_kernel(%arg0: i32, %arg1: i32, %arg2: memref<128x36xbf16, #tpu.memory_space<vmem>>, %arg3: memref<36x128xbf16, #tpu.memory_space<vmem>>, %arg4: memref<128x128xbf16, #tpu.memory_space<vmem>>, %arg5: memref<8x128xf32, #tpu.memory_space<vmem>>, %arg6: memref<8x128xf32, #tpu.memory_space<vmem>>) attributes {dimension_semantics = [#tpu.dimension_semantics<parallel>, #tpu.dimension_semantics<arbitrary>], iteration_bounds = array<i64: 2, 2>, scalar_prefetch = 0 : i64, scratch_operands = 0 : i64, tpu.core_type = #tpu.core_type<tc>, window_params = [{transform_indices = @transform_0, window_bounds = array<i64: 128, 36>}, {pipeline_mode = #tpu.pipeline_mode<synchronous>, transform_indices = @transform_1, window_bounds = array<i64: 36, 128>}, {transform_indices = @transform_2, window_bounds = array<i64: 128, 128>}, {transform_indices = @transform_3, window_bounds = array<i64: 8, 128>}, {transform_indices = @transform_4, window_bounds = array<i64: 8, 128>}]} {
    %c0 = arith.constant 0 : index
    %c0_0 = arith.constant 0 : index
    %0 = vector.load %arg2[%c0, %c0_0] : memref<128x36xbf16, #tpu.memory_space<vmem>>, vector<128x36xbf16>
    %c0_1 = arith.constant 0 : index
    %c0_2 = arith.constant 0 : index
    %1 = vector.load %arg3[%c0_1, %c0_2] : memref<36x128xbf16, #tpu.memory_space<vmem>>, vector<36x128xbf16>
    %cst = arith.constant dense<0.000000e+00> : vector<128x128xf32>
    %2 = tpu.matmul %0, %1, %cst {dimension_numbers = #tpu.dot_dimension_numbers<[1], [0], [0], [1], [0, 0, 1, 1], [], []>} : vector<128x36xbf16>, vector<36x128xbf16>, vector<128x128xf32> -> vector<128x128xf32>
    %3 = arith.truncf %2 : vector<128x128xf32> to vector<128x128xbf16>
    %c0_3 = arith.constant 0 : index
    %c0_4 = arith.constant 0 : index
    %4 = vector.load %arg4[%c0_3, %c0_4] : memref<128x128xbf16, #tpu.memory_space<vmem>>, vector<128x128xbf16>
    tpu.vector_store %arg4[%c0_3, %c0_4], %3 {strides = array<i32>} : memref<128x128xbf16, #tpu.memory_space<vmem>>, vector<128x128xbf16>,
    %c0_i32 = arith.constant 0 : i32
    %5 = arith.cmpi eq, %arg1, %c0_i32 : i32
    %6 = arith.extui %5 : i1 to i32
    %c0_i32_5 = arith.constant 0 : i32
    %7 = arith.cmpi ne, %6, %c0_i32_5 : i32
    scf.if %7 {
      %cst_16 = arith.constant 0.000000e+00 : f32
      %80 = vector.broadcast %cst_16 : f32 to vector<8x128xf32>
      %c0_17 = arith.constant 0 : index
      %c0_18 = arith.constant 0 : index
      %81 = vector.load %arg5[%c0_17, %c0_18] : memref<8x128xf32, #tpu.memory_space<vmem>>, vector<8x128xf32>
      tpu.vector_store %arg5[%c0_17, %c0_18], %80 {strides = array<i32>} : memref<8x128xf32, #tpu.memory_space<vmem>>, vector<8x128xf32>,
      %cst_19 = arith.constant 0.000000e+00 : f32
      %82 = vector.broadcast %cst_19 : f32 to vector<8x128xf32>
      %c0_20 = arith.constant 0 : index
      %c0_21 = arith.constant 0 : index
      %83 = vector.load %arg6[%c0_20, %c0_21] : memref<8x128xf32, #tpu.memory_space<vmem>>, vector<8x128xf32>
      tpu.vector_store %arg6[%c0_20, %c0_21], %82 {strides = array<i32>} : memref<8x128xf32, #tpu.memory_space<vmem>>, vector<8x128xf32>,
    } else {
    }
    %cst_6 = arith.constant 0.000000e+00 : f32
    %8 = vector.broadcast %cst_6 : f32 to vector<8x128xf32>
    %cst_7 = arith.constant 0.000000e+00 : f32
    %9 = vector.broadcast %cst_7 : f32 to vector<8x128xf32>
    %10 = vector.extract_strided_slice %2 {offsets = [0, 0], sizes = [8, 128], strides = [1, 1]} : vector<128x128xf32> to vector<8x128xf32>
    %11 = arith.addf %8, %10 : vector<8x128xf32>
    %12 = arith.mulf %10, %10 : vector<8x128xf32>
    %13 = arith.addf %9, %12 : vector<8x128xf32>
    %14 = vector.extract_strided_slice %2 {offsets = [8, 0], sizes = [8, 128], strides = [1, 1]} : vector<128x128xf32> to vector<8x128xf32>
    %15 = arith.addf %11, %14 : vector<8x128xf32>
    %16 = arith.mulf %14, %14 : vector<8x128xf32>
    %17 = arith.addf %13, %16 : vector<8x128xf32>
    %18 = vector.extract_strided_slice %2 {offsets = [16, 0], sizes = [8, 128], strides = [1, 1]} : vector<128x128xf32> to vector<8x128xf32>
    %19 = arith.addf %15, %18 : vector<8x128xf32>
    %20 = arith.mulf %18, %18 : vector<8x128xf32>
    %21 = arith.addf %17, %20 : vector<8x128xf32>
    %22 = vector.extract_strided_slice %2 {offsets = [24, 0], sizes = [8, 128], strides = [1, 1]} : vector<128x128xf32> to vector<8x128xf32>
    %23 = arith.addf %19, %22 : vector<8x128xf32>
    %24 = arith.mulf %22, %22 : vector<8x128xf32>
    %25 = arith.addf %21, %24 : vector<8x128xf32>
    %26 = vector.extract_strided_slice %2 {offsets = [32, 0], sizes = [8, 128], strides = [1, 1]} : vector<128x128xf32> to vector<8x128xf32>
    %27 = arith.addf %23, %26 : vector<8x128xf32>
    %28 = arith.mulf %26, %26 : vector<8x128xf32>
    %29 = arith.addf %25, %28 : vector<8x128xf32>
    %30 = vector.extract_strided_slice %2 {offsets = [40, 0], sizes = [8, 128], strides = [1, 1]} : vector<128x128xf32> to vector<8x128xf32>
    %31 = arith.addf %27, %30 : vector<8x128xf32>
    %32 = arith.mulf %30, %30 : vector<8x128xf32>
    %33 = arith.addf %29, %32 : vector<8x128xf32>
    %34 = vector.extract_strided_slice %2 {offsets = [48, 0], sizes = [8, 128], strides = [1, 1]} : vector<128x128xf32> to vector<8x128xf32>
    %35 = arith.addf %31, %34 : vector<8x128xf32>
    %36 = arith.mulf %34, %34 : vector<8x128xf32>
    %37 = arith.addf %33, %36 : vector<8x128xf32>
    %38 = vector.extract_strided_slice %2 {offsets = [56, 0], sizes = [8, 128], strides = [1, 1]} : vector<128x128xf32> to vector<8x128xf32>
    %39 = arith.addf %35, %38 : vector<8x128xf32>
    %40 = arith.mulf %38, %38 : vector<8x128xf32>
    %41 = arith.addf %37, %40 : vector<8x128xf32>
    %42 = vector.extract_strided_slice %2 {offsets = [64, 0], sizes = [8, 128], strides = [1, 1]} : vector<128x128xf32> to vector<8x128xf32>
    %43 = arith.addf %39, %42 : vector<8x128xf32>
    %44 = arith.mulf %42, %42 : vector<8x128xf32>
    %45 = arith.addf %41, %44 : vector<8x128xf32>
    %46 = vector.extract_strided_slice %2 {offsets = [72, 0], sizes = [8, 128], strides = [1, 1]} : vector<128x128xf32> to vector<8x128xf32>
    %47 = arith.addf %43, %46 : vector<8x128xf32>
    %48 = arith.mulf %46, %46 : vector<8x128xf32>
    %49 = arith.addf %45, %48 : vector<8x128xf32>
    %50 = vector.extract_strided_slice %2 {offsets = [80, 0], sizes = [8, 128], strides = [1, 1]} : vector<128x128xf32> to vector<8x128xf32>
    %51 = arith.addf %47, %50 : vector<8x128xf32>
    %52 = arith.mulf %50, %50 : vector<8x128xf32>
    %53 = arith.addf %49, %52 : vector<8x128xf32>
    %54 = vector.extract_strided_slice %2 {offsets = [88, 0], sizes = [8, 128], strides = [1, 1]} : vector<128x128xf32> to vector<8x128xf32>
    %55 = arith.addf %51, %54 : vector<8x128xf32>
    %56 = arith.mulf %54, %54 : vector<8x128xf32>
    %57 = arith.addf %53, %56 : vector<8x128xf32>
    %58 = vector.extract_strided_slice %2 {offsets = [96, 0], sizes = [8, 128], strides = [1, 1]} : vector<128x128xf32> to vector<8x128xf32>
    %59 = arith.addf %55, %58 : vector<8x128xf32>
    %60 = arith.mulf %58, %58 : vector<8x128xf32>
    %61 = arith.addf %57, %60 : vector<8x128xf32>
    %62 = vector.extract_strided_slice %2 {offsets = [104, 0], sizes = [8, 128], strides = [1, 1]} : vector<128x128xf32> to vector<8x128xf32>
    %63 = arith.addf %59, %62 : vector<8x128xf32>
    %64 = arith.mulf %62, %62 : vector<8x128xf32>
    %65 = arith.addf %61, %64 : vector<8x128xf32>
    %66 = vector.extract_strided_slice %2 {offsets = [112, 0], sizes = [8, 128], strides = [1, 1]} : vector<128x128xf32> to vector<8x128xf32>
    %67 = arith.addf %63, %66 : vector<8x128xf32>
    %68 = arith.mulf %66, %66 : vector<8x128xf32>
    %69 = arith.addf %65, %68 : vector<8x128xf32>
    %70 = vector.extract_strided_slice %2 {offsets = [120, 0], sizes = [8, 128], strides = [1, 1]} : vector<128x128xf32> to vector<8x128xf32>
    %71 = arith.addf %67, %70 : vector<8x128xf32>
    %72 = arith.mulf %70, %70 : vector<8x128xf32>
    %73 = arith.addf %69, %72 : vector<8x128xf32>
    %c0_8 = arith.constant 0 : index
    %c0_9 = arith.constant 0 : index
    %74 = vector.load %arg5[%c0_8, %c0_9] : memref<8x128xf32, #tpu.memory_space<vmem>>, vector<8x128xf32>
    %75 = arith.addf %74, %71 : vector<8x128xf32>
    %c0_10 = arith.constant 0 : index
    %c0_11 = arith.constant 0 : index
    %76 = vector.load %arg5[%c0_10, %c0_11] : memref<8x128xf32, #tpu.memory_space<vmem>>, vector<8x128xf32>
    tpu.vector_store %arg5[%c0_10, %c0_11], %75 {strides = array<i32>} : memref<8x128xf32, #tpu.memory_space<vmem>>, vector<8x128xf32>,
    %c0_12 = arith.constant 0 : index
    %c0_13 = arith.constant 0 : index
    %77 = vector.load %arg6[%c0_12, %c0_13] : memref<8x128xf32, #tpu.memory_space<vmem>>, vector<8x128xf32>
    %78 = arith.addf %77, %73 : vector<8x128xf32>
    %c0_14 = arith.constant 0 : index
    %c0_15 = arith.constant 0 : index
    %79 = vector.load %arg6[%c0_14, %c0_15] : memref<8x128xf32, #tpu.memory_space<vmem>>, vector<8x128xf32>
    tpu.vector_store %arg6[%c0_14, %c0_15], %78 {strides = array<i32>} : memref<8x128xf32, #tpu.memory_space<vmem>>, vector<8x128xf32>,
    return
  }
  func.func @transform_0(%arg0: i32, %arg1: i32) -> (i32, i32) {
    %c2_i32 = arith.constant 2 : i32
    %0 = arith.muli %arg0, %c2_i32 : i32
    %1 = arith.addi %0, %arg1 : i32
    %c0_i32 = arith.constant 0 : i32
    %c0_i32_0 = arith.constant 0 : i32
    return %1, %c0_i32 : i32, i32
  }
  func.func @transform_1(%arg0: i32, %arg1: i32) -> (i32, i32) {
    %c0_i32 = arith.constant 0 : i32
    %c0_i32_0 = arith.constant 0 : i32
    %c0_i32_1 = arith.constant 0 : i32
    return %c0_i32, %c0_i32_0 : i32, i32
  }
  func.func @transform_2(%arg0: i32, %arg1: i32) -> (i32, i32) {
    %c2_i32 = arith.constant 2 : i32
    %0 = arith.muli %arg0, %c2_i32 : i32
    %1 = arith.addi %0, %arg1 : i32
    %c0_i32 = arith.constant 0 : i32
    %c0_i32_0 = arith.constant 0 : i32
    return %1, %c0_i32 : i32, i32
  }
  func.func @transform_3(%arg0: i32, %arg1: i32) -> (i32, i32) {
    %c0_i32 = arith.constant 0 : i32
    %c0_i32_0 = arith.constant 0 : i32
    return %arg0, %c0_i32 : i32, i32
  }
  func.func @transform_4(%arg0: i32, %arg1: i32) -> (i32, i32) {
    %c0_i32 = arith.constant 0 : i32
    %c0_i32_0 = arith.constant 0 : i32
    return %arg0, %c0_i32 : i32, i32
  }
}

</mosaic_0001>

<llo_original>
// kernel: tpu_custom_call.1
$region0: #{tpu_custom_call.1}
  #allocation0 [shape = 'u32[]', space=smem, size = 0x4, offset = 0x4, fixed_abs, tag = 'smem constant byte address 0x4 - core index']
  #allocation1 [shape = 'u32[144,128]{1,0:T(1,128)}', space=vmem, size = 0x12000, scoped, tag = 'internal scratch']
  %s0 = inlined_call_operand.vmem [shape: bf16[512,36], index: 0, kind: input, shape index: {}]
  %s1 = inlined_call_operand.vmem [shape: bf16[36,128], index: 1, kind: input, shape index: {}]
  %s2 = inlined_call_operand.hbm [shape: bf16[512,128], index: 2, kind: output, shape index: {0}]
  %s3 = inlined_call_operand.hbm [shape: f32[16,128], index: 3, kind: output, shape index: {1}]
  %s4 = inlined_call_operand.hbm [shape: f32[16,128], index: 4, kind: output, shape index: {2}]
  %5 = xla_tuple %s2, %s3, %s4
  %s6 = sld [smem:[#allocation0]]
  $region61: #{tpu_custom_call.1} parent=0
    _
  %s8 = ssub.s32 1, %s6
  %s9 = scalar_select 0, %s8, %s6
  $region1: #{tpu_custom_call.1} parent=0
    #allocation2 [shape = 'u8[65536]{0}', space=vmem, size = 0x10000, scoped, tag = 'output window, operand 0']
    #allocation3 [shape = 's32[2]{0}', space=sflag, size = 0x8, scoped, tag = 'scoped memory for tpu_custom_call.1']
    #allocation4 [shape = 'u8[8192]{0}', space=vmem, size = 0x2000, scoped, tag = 'output window, operand 1']
    #allocation5 [shape = 's32[2]{0}', space=sflag, size = 0x8, scoped, tag = 'scoped memory for tpu_custom_call.1']
    #allocation6 [shape = 'u8[8192]{0}', space=vmem, size = 0x2000, scoped, tag = 'output window, operand 2']
    %10 = vsyncpa [#allocation3], 0
    %s11 = scalar_lea.sflag [#allocation3], 1
    %12 = vsyncpa %s11, 0
    %13 = vsyncpa [#allocation5], 0
    %s14 = scalar_lea.sflag [#allocation5], 1
    %15 = vsyncpa %s14, 0
    loop: start=0, step=1, limit=6
    $region2: #{tpu_custom_call.1} parent=1 // loop_pre_header
      _
    $region3: #{tpu_custom_call.1} parent=1 // loop_header
      %s17 = sphi 0, %s21
      %p18 = scmp.ge.s32.totalorder %s17, 6
      %s24 = sphi 0, %s36
      %s25 = sphi 0, %s32
      %s26 = sphi 0, %s24
      %s27 = sphi 0, %s25
      %s28 = sphi 0, %s26
      %s29 = sphi 0, %s27
      %s43 = sphi 0, %s45
      %s46 = sphi 0, %s43
      %s47 = sphi 0, %s46
      %s63 = sphi 0, %s47
      %s67 = sphi 0, %s67
      %s69 = sphi 0, %s67
      %s70 = sphi 0, %s69
      %s84 = sphi 0, %s70
      %s94 = sphi 0, %s96
      %s97 = sphi 0, %s94
      %s98 = sphi 0, %s97
      %s114 = sphi 0, %s98
      %s120 = sphi 0, %s122
      %s123 = sphi 0, %s120
      %s124 = sphi 0, %s123
      %s140 = sphi 0, %s124
      %s146 = sphi 0, %s148
      %s149 = sphi 0, %s146
      %s150 = sphi 0, %s149
      %s166 = sphi 0, %s150
    $region4: #{tpu_custom_call.1} parent=1 // loop_header_branch
      %20 = sbr.rel (%p18) target = $region8
    $region5: #{tpu_custom_call.1} parent=1 // loop_body
      %s22 = ssub.s32 %s17, 1
      %s23 = ssub.s32 %s17, 2
      %s30 = sadd.s32 1, %s25
      %p31 = scmp.ge.s32.totalorder %s30, 2
      %s32 = scalar_select %p31, 0, %s30
      %s33 = sadd.s32 1, %s24
      %s34 = scalar_select %p31, %s33, %s24
      %p35 = scmp.ge.s32.totalorder %s34, 2
      %s36 = scalar_select %p35, 0, %s34
      %s37 = smul.u32 %s24, 2
      %s38 = sadd.s32 %s37, %s25
      %s39 = smul.u32 %s36, 2
      %s40 = sadd.s32 %s39, %s32
      %s41 = ssub.s32 %s38, %s40
      %p42 = scmp.eq.s32.totalorder %s41, 0
      %s44 = sadd.s32 %s43, 1
      %s45 = scalar_select %p42, %s43, %s44
      %p48 = pneg %p42
      %p49 = scmp.eq.s32.totalorder %s17, 3
      %p50 = por %p48, %p49
      %p51 = scmp.ne.s32.totalorder %s43, %s46
      %p52 = scmp.eq.s32.totalorder %s17, 0
      %p53 = por %p51, %p52
      %p54 = scmp.ne.s32.totalorder %s43, %s46
      %p55 = scmp.eq.s32.totalorder %s22, 3
      %p56 = por %p54, %p55
      %p57 = scmp.ne.s32.totalorder %s46, %s47
      %p58 = scmp.eq.s32.totalorder %s22, 0
      %p59 = por %p57, %p58
      %p60 = scmp.ne.s32.totalorder %s46, %s47
      %p61 = scmp.eq.s32.totalorder %s23, 3
      %p62 = por %p60, %p61
      %p64 = scmp.ne.s32.totalorder %s47, %s63
      %p65 = scmp.eq.s32.totalorder %s23, 0
      %p66 = por %p64, %p65
      %s68 = sadd.s32 %s67, 1
      %p71 = scmp.eq.s32.totalorder %s17, 3
      %p72 = scmp.ne.s32.totalorder %s67, %s69
      %p73 = scmp.eq.s32.totalorder %s17, 0
      %p74 = por %p72, %p73
      %p75 = scmp.ne.s32.totalorder %s67, %s69
      %p76 = scmp.eq.s32.totalorder %s22, 3
      %p77 = por %p75, %p76
      %p78 = scmp.ne.s32.totalorder %s69, %s70
      %p79 = scmp.eq.s32.totalorder %s22, 0
      %p80 = por %p78, %p79
      %p81 = scmp.ne.s32.totalorder %s69, %s70
      %p82 = scmp.eq.s32.totalorder %s23, 3
      %p83 = por %p81, %p82
      %p85 = scmp.ne.s32.totalorder %s70, %s84
      %p86 = scmp.eq.s32.totalorder %s23, 0
      %p87 = por %p85, %p86
      %s88 = smul.u32 %s24, 2
      %s89 = sadd.s32 %s88, %s25
      %s90 = smul.u32 %s36, 2
      %s91 = sadd.s32 %s90, %s32
      %s92 = ssub.s32 %s89, %s91
      %p93 = scmp.eq.s32.totalorder %s92, 0
      %s95 = sadd.s32 %s94, 1
      %s96 = scalar_select %p93, %s94, %s95
      %p99 = pneg %p93
      %p100 = scmp.eq.s32.totalorder %s17, 3
      %p101 = por %p99, %p100
      %p102 = scmp.ne.s32.totalorder %s94, %s97
      %p103 = scmp.eq.s32.totalorder %s17, 0
      %p104 = por %p102, %p103
      %p105 = scmp.ne.s32.totalorder %s94, %s97
      %p106 = scmp.eq.s32.totalorder %s22, 3
      %p107 = por %p105, %p106
      %p108 = scmp.ne.s32.totalorder %s97, %s98
      %p109 = scmp.eq.s32.totalorder %s22, 0
      %p110 = por %p108, %p109
      %p111 = scmp.ne.s32.totalorder %s97, %s98
      %p112 = scmp.eq.s32.totalorder %s23, 3
      %p113 = por %p111, %p112
      %p115 = scmp.ne.s32.totalorder %s98, %s114
      %p116 = scmp.eq.s32.totalorder %s23, 0
      %p117 = por %p115, %p116
      %s118 = ssub.s32 %s24, %s36
      %p119 = scmp.eq.s32.totalorder %s118, 0
      %s121 = sadd.s32 %s120, 1
      %s122 = scalar_select %p119, %s120, %s121
      %p125 = pneg %p119
      %p126 = scmp.eq.s32.totalorder %s17, 3
      %p127 = por %p125, %p126
      %p128 = scmp.ne.s32.totalorder %s120, %s123
      %p129 = scmp.eq.s32.totalorder %s17, 0
      %p130 = por %p128, %p129
      %p131 = scmp.ne.s32.totalorder %s120, %s123
      %p132 = scmp.eq.s32.totalorder %s22, 3
      %p133 = por %p131, %p132
      %p134 = scmp.ne.s32.totalorder %s123, %s124
      %p135 = scmp.eq.s32.totalorder %s22, 0
      %p136 = por %p134, %p135
      %p137 = scmp.ne.s32.totalorder %s123, %s124
      %p138 = scmp.eq.s32.totalorder %s23, 3
      %p139 = por %p137, %p138
      %p141 = scmp.ne.s32.totalorder %s124, %s140
      %p142 = scmp.eq.s32.totalorder %s23, 0
      %p143 = por %p141, %p142
      %s144 = ssub.s32 %s24, %s36
      %p145 = scmp.eq.s32.totalorder %s144, 0
      %s147 = sadd.s32 %s146, 1
      %s148 = scalar_select %p145, %s146, %s147
      %p151 = pneg %p145
      %p152 = scmp.eq.s32.totalorder %s17, 3
      %p153 = por %p151, %p152
      %p154 = scmp.ne.s32.totalorder %s146, %s149
      %p155 = scmp.eq.s32.totalorder %s17, 0
      %p156 = por %p154, %p155
      %p157 = scmp.ne.s32.totalorder %s146, %s149
      %p158 = scmp.eq.s32.totalorder %s22, 3
      %p159 = por %p157, %p158
      %p160 = scmp.ne.s32.totalorder %s149, %s150
      %p161 = scmp.eq.s32.totalorder %s22, 0
      %p162 = por %p160, %p161
      %p163 = scmp.ne.s32.totalorder %s149, %s150
      %p164 = scmp.eq.s32.totalorder %s23, 3
      %p165 = por %p163, %p164
      %p167 = scmp.ne.s32.totalorder %s150, %s166
      %p168 = scmp.eq.s32.totalorder %s23, 0
      %p169 = por %p167, %p168
      %p170 = scmp.le.s32.totalorder 1, %s17
      %p171 = scmp.lt.s32.totalorder %s17, 5
      %p172 = pnand %p170, %p171
      %p173 = pneg %p172
      // Predicated region
      $region9: #{tpu_custom_call.1} parent=5 // pred_check
        _
      $region10: #{tpu_custom_call.1} parent=5 // pred_check_branch
        %175 = sbr.rel (%p172) target = $region12
      $region11: #{tpu_custom_call.1} parent=5 // pred_region
        %s176 = ssub.s32 %s17, 1
        // Predicated region
        $region13: #{tpu_custom_call.1} parent=11 // pred_check
          %p177 = pneg %p80
        $region14: #{tpu_custom_call.1} parent=11 // pred_check_branch
          %179 = sbr.rel (%p177) target = $region16
        $region15: #{tpu_custom_call.1} parent=11 // pred_region
          _
        $region16: #{tpu_custom_call.1} parent=11 // pred_fallthru
          _
      $region12: #{tpu_custom_call.1} parent=5 // pred_fallthru
        _
      %p180 = scmp.lt.s32.totalorder %s17, 4
      // Predicated region
      $region17: #{tpu_custom_call.1} parent=5 // pred_check
        %p181 = pneg %p180
      $region18: #{tpu_custom_call.1} parent=5 // pred_check_branch
        %183 = sbr.rel (%p181) target = $region20
      $region19: #{tpu_custom_call.1} parent=5 // pred_region
        // Predicated region
        $region21: #{tpu_custom_call.1} parent=19 // pred_check
          %p184 = pneg %p53
        $region22: #{tpu_custom_call.1} parent=19 // pred_check_branch
          %186 = sbr.rel (%p184) target = $region24
        $region23: #{tpu_custom_call.1} parent=19 // pred_region
          %s187 = smul.u32 %s24, 2
          %s188 = sadd.s32 %s187, %s25
          %s189 = smul.u32 16, %s188
          %p190 = scmp.lt.s32.totalorder %s189, 63
          %s191 = scalar_select %p190, %s189, 63
          %s192 = smul.addr %s191, 4
          %s193 = scalar_lea.vmem %s0, %s192
          %s194 = smul.u32 %s24, 2
          %s195 = sadd.s32 %s194, %s25
          %s196 = smul.u32 16, %s195
        $region24: #{tpu_custom_call.1} parent=19 // pred_fallthru
          _
      $region20: #{tpu_custom_call.1} parent=5 // pred_fallthru
        _
      %p197 = scmp.le.s32.totalorder 1, %s17
      %p198 = scmp.lt.s32.totalorder %s17, 5
      %p199 = pnand %p197, %p198
      %p200 = pneg %p199
      // Predicated region
      $region25: #{tpu_custom_call.1} parent=5 // pred_check
        _
      $region26: #{tpu_custom_call.1} parent=5 // pred_check_branch
        %202 = sbr.rel (%p199) target = $region28
      $region27: #{tpu_custom_call.1} parent=5 // pred_region
        %s203 = ssub.s32 %s17, 1
        %s204 = smul.u32 %s26, 2
        %s205 = sadd.s32 %s204, %s27
        %s206 = smul.u32 16, %s205
        %p207 = scmp.lt.s32.totalorder %s206, 63
        %s208 = scalar_select %p207, %s206, 63
        %s209 = smul.addr %s208, 4
        %s210 = scalar_lea.vmem %s0, %s209
        %p211 = pneg %p59
        %p212 = pneg %p56
        %p213 = pneg %p80
        %p214 = pneg %p77
        %p215 = pneg %p110
        %p216 = pneg %p107
        %s217 = sand.u32 %s97, 1
        %s218 = scalar_lea.sflag [#allocation3], %s217
        %s219 = sand.u32 %s97, 1
        %s220 = smul.addr %s219, 64
        %s221 = scalar_lea.vmem [#allocation2], %s220
        %p222 = pneg %p136
        %p223 = pneg %p133
        %s224 = sand.u32 %s22, 1
        %s225 = scalar_lea.sflag [#allocation5], %s224
        %s226 = sand.u32 %s123, 1
        %s227 = smul.addr %s226, 8
        %s228 = scalar_lea.vmem [#allocation4], %s227
        %p229 = pneg %p162
        %p230 = pneg %p159
        %s231 = sand.u32 %s22, 1
        %s232 = scalar_lea.sflag [#allocation5], %s231
        %s233 = sand.u32 %s149, 1
        %s234 = smul.addr %s233, 8
        %s235 = scalar_lea.vmem [#allocation6], %s234
        %s236 = smul.u32 %s26, 2
        %s237 = sadd.s32 %s236, %s27
        %s238 = smul.u32 16, %s237
        %p239 = scmp.lt.s32.totalorder %s238, 63
        %s240 = scalar_select %p239, %s238, 63
        %s241 = smul.addr %s240, 4
        %s242 = scalar_lea.vmem %s0, %s241
        %s243 = smul.u32 %s26, 2
        %s244 = sadd.s32 %s243, %s27
        %s245 = smul.u32 16, %s244
        %s246 = smul.u32 %s26, 2
        %s247 = sadd.s32 %s246, %s27
        %s248 = smul.u32 16, %s247
        %v250 = vld [vmem:[%s242] sm:$0xf]
        %v251 = vld [vmem:[%s242 + $0x4] sm:$0xf]
        %v252 = vld [vmem:[%s242 + $0x8] sm:$0xf]
        %v253 = vld [vmem:[%s242 + $0xc] sm:$0xf]
        %v254 = vld [vmem:[%s242 + $0x10] sm:$0xf]
        %v255 = vld [vmem:[%s242 + $0x14] sm:$0xf]
        %v256 = vld [vmem:[%s242 + $0x18] sm:$0xf]
        %v257 = vld [vmem:[%s242 + $0x1c] sm:$0xf]
        %v258 = vld [vmem:[%s242 + $0x20] sm:$0xf]
        %v259 = vld [vmem:[%s242 + $0x24] sm:$0xf]
        %v260 = vld [vmem:[%s242 + $0x28] sm:$0xf]
        %v261 = vld [vmem:[%s242 + $0x2c] sm:$0xf]
        %v262 = vld [vmem:[%s242 + $0x30] sm:$0xf]
        %v263 = vld [vmem:[%s242 + $0x34] sm:$0xf]
        %v264 = vld [vmem:[%s242 + $0x38] sm:$0xf]
        %v265 = vld [vmem:[%s242 + $0x3c] sm:$0xf]
        %v266 = vld [vmem:[%s1] sm:$0xf]
        %v267 = vld [vmem:[%s1 + $0x4] sm:$0xf]
        %v268 = vld [vmem:[%s1 + $0x8] sm:$0xf]
        %v269 = vld [vmem:[%s1 + $0xc] sm:$0xf]
        %v270 = vld [vmem:[%s1 + $0x10] sm:$0x3]
        %v287 = vunpack.c.l.b16 %v250
        %v288 = vunpack.c.l.b16 %v251
        %v289 = vunpack.c.l.b16 %v252
        %v290 = vunpack.c.l.b16 %v253
        %v291 = vunpack.c.l.b16 %v254
        %v292 = vunpack.c.l.b16 %v255
        %v293 = vunpack.c.l.b16 %v256
        %v294 = vunpack.c.l.b16 %v257
        %v295 = vunpack.c.l.b16 %v258
        %v296 = vunpack.c.l.b16 %v259
        %v297 = vunpack.c.l.b16 %v260
        %v298 = vunpack.c.l.b16 %v261
        %v299 = vunpack.c.l.b16 %v262
        %v300 = vunpack.c.l.b16 %v263
        %v301 = vunpack.c.l.b16 %v264
        %v302 = vunpack.c.l.b16 %v265
        %v303 = vpack.c.b16 %v288, %v287
        %v304 = vpack.c.b16 %v290, %v289
        %v305 = vpack.c.b16 %v292, %v291
        %v306 = vpack.c.b16 %v294, %v293
        %v307 = vpack.c.b16 %v296, %v295
        %v308 = vpack.c.b16 %v298, %v297
        %v309 = vpack.c.b16 %v300, %v299
        %v310 = vpack.c.b16 %v302, %v301
        %v316 = vunpack.c.l.b16 %v266
        %v317 = vunpack.c.l.b16 %v267
        %v318 = vunpack.c.l.b16 %v268
        %v319 = vunpack.c.l.b16 %v269
        %v320 = vunpack.c.l.b16 %v270
        %v321 = vpack.c.b16 %v317, %v316
        %v322 = vpack.c.b16 %v319, %v318
        %v323 = vpack.c.b16 %v320, %v320
        %vm326 = vcmask 293888
        %v328 = vsel %vm326, %v303, 0
        %v331 = vsel %vm326, %v304, 0
        %v334 = vsel %vm326, %v305, 0
        %v337 = vsel %vm326, %v306, 0
        %v340 = vsel %vm326, %v307, 0
        %v343 = vsel %vm326, %v308, 0
        %v346 = vsel %vm326, %v309, 0
        %v349 = vsel %vm326, %v310, 0
        %vm351 = vcmask 1041408
        %v353 = vsel %vm351, %v323, 0
        %355 = vmatprep.subr.bf16.mxu0 0
        %356 = vmatpush1.bf16.msra.mxu0 0
        %357 = vmatprep.subr.bf16.mxu0 0
        %358 = vmatpush1.bf16.msra.mxu0 0
        %359 = vmatprep.subr.bf16.mxu0 0
        %360 = vmatpush1.bf16.msra.mxu0 0
        %361 = vmatprep.subr.bf16.mxu0 0
        %362 = vmatpush1.bf16.msra.mxu0 0
        %363 = vmatprep.subr.bf16.mxu0 0
        %364 = vmatpush1.bf16.msra.mxu0 0
        %365 = vmatprep.subr.bf16.mxu0 0
        %366 = vmatpush1.bf16.msra.mxu0 %v353
        %367 = vmatprep.subr.bf16.mxu0 0
        %368 = vmatpush1.bf16.msra.mxu0 %v322
        %369 = vmatprep.subr.bf16.mxu0 0
        %370 = vmatpush1.bf16.msra.mxu0 %v321
        %371 = vmatprep.subr.bf16.mxu0 0
        %372 = vmatpush2.bf16.msra.mxu0 0
        %373 = vmatprep.subr.bf16.mxu0 0
        %374 = vmatpush2.bf16.msra.mxu0 0
        %375 = vmatprep.subr.bf16.mxu0 0
        %376 = vmatpush2.bf16.msra.mxu0 0
        %377 = vmatprep.subr.bf16.mxu0 0
        %378 = vmatpush2.bf16.msra.mxu0 0
        %379 = vmatprep.subr.bf16.mxu0 0
        %380 = vmatpush2.bf16.msra.mxu0 0
        %381 = vmatprep.subr.bf16.mxu0 0
        %382 = vmatpush2.bf16.msra.mxu0 0
        %383 = vmatprep.subr.bf16.mxu0 0
        %384 = vmatpush2.bf16.msra.mxu0 0
        %385 = vmatprep.subr.bf16.mxu0 0
        %386 = vmatpush2.bf16.msra.mxu0 0
        %387 = vmatprep.mubr.bf16.mxu0 0
        %388 = vmatmul.mubr.bf16.gmra.mxu0 %v328
        %v389 = vpop.f32.mrf.mxu0
        %v390 = vadd.f32 0.0, %v389
        %v391 = vpop.f32.mrf.mxu0
        %v392 = vpop.f32.mrf.mxu0
        %v393 = vadd.f32 0.0, %v392
        %v394 = vpop.f32.mrf.mxu0
        %395 = vmatprep.mubr.bf16.mxu0 0
        %396 = vmatmul.mubr.bf16.gmra.mxu0 %v331
        %v397 = vpop.f32.mrf.mxu0
        %v398 = vadd.f32 0.0, %v397
        %v399 = vpop.f32.mrf.mxu0
        %v400 = vpop.f32.mrf.mxu0
        %v401 = vadd.f32 0.0, %v400
        %v402 = vpop.f32.mrf.mxu0
        %403 = vmatprep.mubr.bf16.mxu0 0
        %404 = vmatmul.mubr.bf16.gmra.mxu0 %v334
        %v405 = vpop.f32.mrf.mxu0
        %v406 = vadd.f32 0.0, %v405
        %v407 = vpop.f32.mrf.mxu0
        %v408 = vpop.f32.mrf.mxu0
        %v409 = vadd.f32 0.0, %v408
        %v410 = vpop.f32.mrf.mxu0
        %411 = vmatprep.mubr.bf16.mxu0 0
        %412 = vmatmul.mubr.bf16.gmra.mxu0 %v337
        %v413 = vpop.f32.mrf.mxu0
        %v414 = vadd.f32 0.0, %v413
        %v415 = vpop.f32.mrf.mxu0
        %v416 = vpop.f32.mrf.mxu0
        %v417 = vadd.f32 0.0, %v416
        %v418 = vpop.f32.mrf.mxu0
        %419 = vmatprep.mubr.bf16.mxu0 0
        %420 = vmatmul.mubr.bf16.gmra.mxu0 %v340
        %v421 = vpop.f32.mrf.mxu0
        %v422 = vadd.f32 0.0, %v421
        %v423 = vpop.f32.mrf.mxu0
        %v424 = vpop.f32.mrf.mxu0
        %v425 = vadd.f32 0.0, %v424
        %v426 = vpop.f32.mrf.mxu0
        %427 = vmatprep.mubr.bf16.mxu0 0
        %428 = vmatmul.mubr.bf16.gmra.mxu0 %v343
        %v429 = vpop.f32.mrf.mxu0
        %v430 = vadd.f32 0.0, %v429
        %v431 = vpop.f32.mrf.mxu0
        %v432 = vpop.f32.mrf.mxu0
        %v433 = vadd.f32 0.0, %v432
        %v434 = vpop.f32.mrf.mxu0
        %435 = vmatprep.mubr.bf16.mxu0 0
        %436 = vmatmul.mubr.bf16.gmra.mxu0 %v346
        %v437 = vpop.f32.mrf.mxu0
        %v438 = vadd.f32 0.0, %v437
        %v439 = vpop.f32.mrf.mxu0
        %v440 = vpop.f32.mrf.mxu0
        %v441 = vadd.f32 0.0, %v440
        %v442 = vpop.f32.mrf.mxu0
        %443 = vmatprep.mubr.bf16.mxu0 0
        %444 = vmatmul.mubr.bf16.gmra.mxu0 %v349
        %v445 = vpop.f32.mrf.mxu0
        %v446 = vadd.f32 0.0, %v445
        %v447 = vpop.f32.mrf.mxu0
        %v448 = vpop.f32.mrf.mxu0
        %v449 = vadd.f32 0.0, %v448
        %v450 = vpop.f32.mrf.mxu0
        %451 = vdwg.mxu0
        %v452 = vpack.c.bf16 %v393, %v390
        %v453 = vpack.c.bf16 %v401, %v398
        %v454 = vpack.c.bf16 %v409, %v406
        %v455 = vpack.c.bf16 %v417, %v414
        %v456 = vpack.c.bf16 %v425, %v422
        %v457 = vpack.c.bf16 %v433, %v430
        %v458 = vpack.c.bf16 %v441, %v438
        %v459 = vpack.c.bf16 %v449, %v446
        %v468 = vunpack.c.l.b16 %v452
        %v469 = vunpack.c.h.b16 %v452
        %v470 = vunpack.c.l.b16 %v453
        %v471 = vunpack.c.h.b16 %v453
        %v472 = vunpack.c.l.b16 %v454
        %v473 = vunpack.c.h.b16 %v454
        %v474 = vunpack.c.l.b16 %v455
        %v475 = vunpack.c.h.b16 %v455
        %v476 = vunpack.c.l.b16 %v456
        %v477 = vunpack.c.h.b16 %v456
        %v478 = vunpack.c.l.b16 %v457
        %v479 = vunpack.c.h.b16 %v457
        %v480 = vunpack.c.l.b16 %v458
        %v481 = vunpack.c.h.b16 %v458
        %v482 = vunpack.c.l.b16 %v459
        %v483 = vunpack.c.h.b16 %v459
        %v484 = vpack.c.b16 %v468, %v468
        %v485 = vpack.c.b16 %v469, %v469
        %v486 = vpack.c.b16 %v470, %v470
        %v487 = vpack.c.b16 %v471, %v471
        %v488 = vpack.c.b16 %v472, %v472
        %v489 = vpack.c.b16 %v473, %v473
        %v490 = vpack.c.b16 %v474, %v474
        %v491 = vpack.c.b16 %v475, %v475
        %v492 = vpack.c.b16 %v476, %v476
        %v493 = vpack.c.b16 %v477, %v477
        %v494 = vpack.c.b16 %v478, %v478
        %v495 = vpack.c.b16 %v479, %v479
        %v496 = vpack.c.b16 %v480, %v480
        %v497 = vpack.c.b16 %v481, %v481
        %v498 = vpack.c.b16 %v482, %v482
        %v499 = vpack.c.b16 %v483, %v483
        %516 = vst [vmem:[%s221] sm:$0xf] %v484
        %517 = vst [vmem:[%s221 + $0x4] sm:$0xf] %v485
        %518 = vst [vmem:[%s221 + $0x8] sm:$0xf] %v486
        %519 = vst [vmem:[%s221 + $0xc] sm:$0xf] %v487
        %520 = vst [vmem:[%s221 + $0x10] sm:$0xf] %v488
        %521 = vst [vmem:[%s221 + $0x14] sm:$0xf] %v489
        %522 = vst [vmem:[%s221 + $0x18] sm:$0xf] %v490
        %523 = vst [vmem:[%s221 + $0x1c] sm:$0xf] %v491
        %524 = vst [vmem:[%s221 + $0x20] sm:$0xf] %v492
        %525 = vst [vmem:[%s221 + $0x24] sm:$0xf] %v493
        %526 = vst [vmem:[%s221 + $0x28] sm:$0xf] %v494
        %527 = vst [vmem:[%s221 + $0x2c] sm:$0xf] %v495
        %528 = vst [vmem:[%s221 + $0x30] sm:$0xf] %v496
        %529 = vst [vmem:[%s221 + $0x34] sm:$0xf] %v497
        %530 = vst [vmem:[%s221 + $0x38] sm:$0xf] %v498
        %531 = vst [vmem:[%s221 + $0x3c] sm:$0xf] %v499
        %p532 = scmp.eq.s32.totalorder %s27, 0
        // Predicated region
        $region29: #{tpu_custom_call.1} parent=27 // pred_check
          %p533 = pneg %p532
        $region30: #{tpu_custom_call.1} parent=27 // pred_check_branch
          %535 = sbr.rel (%p533) target = $region32
        $region31: #{tpu_custom_call.1} parent=27 // pred_region
          %536 = vst [vmem:[%s228] sm:$0xff] 0.0
          %537 = vst [vmem:[%s235] sm:$0xff] 0.0
        $region32: #{tpu_custom_call.1} parent=27 // pred_fallthru
          _
        %v538 = vadd.f32 %v390, 0.0
        %v539 = vmul.f32 %v390, %v390
        %v540 = vadd.f32 %v539, 0.0
        %v541 = vadd.f32 %v538, %v393
        %v542 = vmul.f32 %v393, %v393
        %v543 = vadd.f32 %v540, %v542
        %v544 = vadd.f32 %v541, %v398
        %v545 = vmul.f32 %v398, %v398
        %v546 = vadd.f32 %v543, %v545
        %v547 = vadd.f32 %v544, %v401
        %v548 = vmul.f32 %v401, %v401
        %v549 = vadd.f32 %v546, %v548
        %v550 = vadd.f32 %v547, %v406
        %v551 = vmul.f32 %v406, %v406
        %v552 = vadd.f32 %v549, %v551
        %v553 = vadd.f32 %v550, %v409
        %v554 = vmul.f32 %v409, %v409
        %v555 = vadd.f32 %v552, %v554
        %v556 = vadd.f32 %v553, %v414
        %v557 = vmul.f32 %v414, %v414
        %v558 = vadd.f32 %v555, %v557
        %v559 = vadd.f32 %v556, %v417
        %v560 = vmul.f32 %v417, %v417
        %v561 = vadd.f32 %v558, %v560
        %v562 = vadd.f32 %v559, %v422
        %v563 = vmul.f32 %v422, %v422
        %v564 = vadd.f32 %v561, %v563
        %v565 = vadd.f32 %v562, %v425
        %v566 = vmul.f32 %v425, %v425
        %v567 = vadd.f32 %v564, %v566
        %v568 = vadd.f32 %v565, %v430
        %v569 = vmul.f32 %v430, %v430
        %v570 = vadd.f32 %v567, %v569
        %v571 = vadd.f32 %v568, %v433
        %v572 = vmul.f32 %v433, %v433
        %v573 = vadd.f32 %v570, %v572
        %v574 = vadd.f32 %v571, %v438
        %v575 = vmul.f32 %v438, %v438
        %v576 = vadd.f32 %v573, %v575
        %v577 = vadd.f32 %v574, %v441
        %v578 = vmul.f32 %v441, %v441
        %v579 = vadd.f32 %v576, %v578
        %v580 = vadd.f32 %v577, %v446
        %v581 = vmul.f32 %v446, %v446
        %v582 = vadd.f32 %v579, %v581
        %v583 = vadd.f32 %v580, %v449
        %v584 = vmul.f32 %v449, %v449
        %v585 = vadd.f32 %v582, %v584
        %v586 = vld [vmem:[%s228] sm:$0xff]
        %v587 = vadd.f32 %v586, %v583
        %588 = vst [vmem:[%s228] sm:$0xff] %v587
        %v589 = vld [vmem:[%s235] sm:$0xff]
        %v590 = vadd.f32 %v589, %v585
        %591 = vst [vmem:[%s235] sm:$0xff] %v590
        %s592 = sand.u32 %s97, 1
        %s593 = scalar_lea.sflag [#allocation3], %s592
        %s594 = sand.u32 %s97, 1
        %s595 = smul.addr %s594, 64
        %s596 = scalar_lea.vmem [#allocation2], %s595
        %s597 = sand.u32 %s22, 1
        %s598 = scalar_lea.sflag [#allocation5], %s597
        %s599 = sand.u32 %s123, 1
        %s600 = smul.addr %s599, 8
        %s601 = scalar_lea.vmem [#allocation4], %s600
        %s602 = sand.u32 %s22, 1
        %s603 = scalar_lea.sflag [#allocation5], %s602
        %s604 = sand.u32 %s149, 1
        %s605 = smul.addr %s604, 8
        %s606 = scalar_lea.vmem [#allocation6], %s605
        // Predicated region
        $region33: #{tpu_custom_call.1} parent=27 // pred_check
          %p607 = pneg %p107
        $region34: #{tpu_custom_call.1} parent=27 // pred_check_branch
          %609 = sbr.rel (%p607) target = $region36
        $region35: #{tpu_custom_call.1} parent=27 // pred_region
          %s610 = smul.u32 %s26, 2
          %s611 = sadd.s32 %s610, %s27
          %s612 = smul.u32 16, %s611
          %s614 = ssub.s32 1024, 1024
          %615 = vsyncadd %s593, %s614
          %s616 = smul.addr %s612, 64
          %s617 = scalar_lea.hbm %s2, %s616
          %s618 = sshll.u32 %s596, 4
          %s619 = int_to_ptr.vmem [resolvable:$true] %s618
          %624 = dma.vmem_to_hbm [thread:$0]  %s619, 1024, %s617, %s593, 64, 64, 4
        $region36: #{tpu_custom_call.1} parent=27 // pred_fallthru
          _
        // Predicated region
        $region37: #{tpu_custom_call.1} parent=27 // pred_check
          %p625 = pneg %p133
        $region38: #{tpu_custom_call.1} parent=27 // pred_check_branch
          %627 = sbr.rel (%p625) target = $region40
        $region39: #{tpu_custom_call.1} parent=27 // pred_region
          %s629 = ssub.s32 128, 128
          %630 = vsyncadd %s598, %s629
          %s631 = smul.addr %s26, 128
          %s632 = scalar_lea.hbm %s3, %s631
          %s634 = sshll.u32 %s601, 4
          %s635 = int_to_ptr.vmem [resolvable:$true] %s634
          %637 = dma.vmem_to_hbm [thread:$0]  %s635, 128, %s632, %s598
        $region40: #{tpu_custom_call.1} parent=27 // pred_fallthru
          _
        // Predicated region
        $region41: #{tpu_custom_call.1} parent=27 // pred_check
          %p638 = pneg %p159
        $region42: #{tpu_custom_call.1} parent=27 // pred_check_branch
          %640 = sbr.rel (%p638) target = $region44
        $region43: #{tpu_custom_call.1} parent=27 // pred_region
          %s642 = ssub.s32 128, 128
          %643 = vsyncadd %s603, %s642
          %s644 = smul.addr %s26, 128
          %s645 = scalar_lea.hbm %s4, %s644
          %s647 = sshll.u32 %s606, 4
          %s648 = int_to_ptr.vmem [resolvable:$true] %s647
          %650 = dma.vmem_to_hbm [thread:$0]  %s648, 128, %s645, %s603
        $region44: #{tpu_custom_call.1} parent=27 // pred_fallthru
          _
      $region28: #{tpu_custom_call.1} parent=5 // pred_fallthru
        _
      %p651 = scmp.le.s32.totalorder 2, %s17
      // Predicated region
      $region45: #{tpu_custom_call.1} parent=5 // pred_check
        %p652 = pneg %p651
      $region46: #{tpu_custom_call.1} parent=5 // pred_check_branch
        %654 = sbr.rel (%p652) target = $region48
      $region47: #{tpu_custom_call.1} parent=5 // pred_region
        %s655 = ssub.s32 %s17, 2
        // Predicated region
        $region49: #{tpu_custom_call.1} parent=47 // pred_check
          %p656 = pneg %p113
        $region50: #{tpu_custom_call.1} parent=47 // pred_check_branch
          %658 = sbr.rel (%p656) target = $region52
        $region51: #{tpu_custom_call.1} parent=47 // pred_region
          %s659 = sand.u32 %s98, 1
          %s660 = scalar_lea.sflag [#allocation3], %s659
          %s661 = sand.u32 %s98, 1
          %s662 = smul.addr %s661, 64
          %s663 = scalar_lea.vmem [#allocation2], %s662
          %664 = dma.done %s660, 1024
        $region52: #{tpu_custom_call.1} parent=47 // pred_fallthru
          _
        // Predicated region
        $region53: #{tpu_custom_call.1} parent=47 // pred_check
          %p665 = pneg %p139
        $region54: #{tpu_custom_call.1} parent=47 // pred_check_branch
          %667 = sbr.rel (%p665) target = $region56
        $region55: #{tpu_custom_call.1} parent=47 // pred_region
          %s668 = sand.u32 %s23, 1
          %s669 = scalar_lea.sflag [#allocation5], %s668
          %s670 = sand.u32 %s124, 1
          %s671 = smul.addr %s670, 8
          %s672 = scalar_lea.vmem [#allocation4], %s671
          %673 = dma.done %s669, 128
        $region56: #{tpu_custom_call.1} parent=47 // pred_fallthru
          _
        // Predicated region
        $region57: #{tpu_custom_call.1} parent=47 // pred_check
          %p674 = pneg %p165
        $region58: #{tpu_custom_call.1} parent=47 // pred_check_branch
          %676 = sbr.rel (%p674) target = $region60
        $region59: #{tpu_custom_call.1} parent=47 // pred_region
          %s677 = sand.u32 %s23, 1
          %s678 = scalar_lea.sflag [#allocation5], %s677
          %s679 = sand.u32 %s150, 1
          %s680 = smul.addr %s679, 8
          %s681 = scalar_lea.vmem [#allocation6], %s680
          %682 = dma.done %s678, 128
        $region60: #{tpu_custom_call.1} parent=47 // pred_fallthru
          _
      $region48: #{tpu_custom_call.1} parent=5 // pred_fallthru
        _
    $region6: #{tpu_custom_call.1} parent=1 // loop_footer
      %s21 = sadd.s32 1, %s17
    $region7: #{tpu_custom_call.1} parent=1 // loop_footer_branch
      %16 = sbr.rel target = $region3
    $region8: #{tpu_custom_call.1} parent=1 // loop_exit
      _
    %683 = vsyncpa [#allocation3], 1
    %s684 = scalar_lea.sflag [#allocation3], 1
    %685 = vsyncpa %s684, 1
    %686 = vsyncpa [#allocation5], 1
    %s687 = scalar_lea.sflag [#allocation5], 1
    %688 = vsyncpa %s687, 1

</llo_original>
